<compile_context>
chip_gen: v6e
topology: v6e:2x2x1
jax: 0.10.0
libtpu: 0.0.40
codegen_flags: <defaults>
</compile_context>

<pallas_src>
import jax
import jax.numpy as jnp
from jax.experimental import pallas as pl
from jax.experimental.pallas import tpu as pltpu


def basic_nn_kernel(params_ref, x_ref, o_ref):
    # params_ref: SMEM f32[7] = [w00, b00, w01, w10, b10, w11, final_bias]
    w00 = params_ref[0]
    b00 = params_ref[1]
    w01 = params_ref[2]
    w10 = params_ref[3]
    b10 = params_ref[4]
    w11 = params_ref[5]
    final_bias = params_ref[6]

    x = x_ref[...]

    # Two ReLU paths (mul-add form), then final ReLU.
    top = jnp.maximum(x * w00 + b00, 0.0) * w01
    bot = jnp.maximum(x * w10 + b10, 0.0) * w11
    o_ref[...] = jnp.maximum(top + bot + final_bias, 0.0)


_LANES = 512            # lane-dense: multiple of 128 -> unmasked vst stores
_MAX_BLOCK_ROWS = 512   # 512x512 f32 tile = 1 MiB; in+out double-buffered ~4 MiB


def basic_nn_forward(x, params):
    """Elementwise BasicNN forward. x: f32 array of any shape; params: f32[7]."""
    orig_shape = x.shape
    flat = x.reshape(-1)
    n = flat.shape[0]

    # Lay the data out as a lane-dense (rows, _LANES) slab.
    rows = max(1, pl.cdiv(n, _LANES))
    rows = ((rows + 7) // 8) * 8                      # sublane multiple of 8
    block_rows = min(_MAX_BLOCK_ROWS, rows)           # multiple of 8 by construction
    rows = pl.cdiv(rows, block_rows) * block_rows     # whole number of grid blocks

    padded = rows * _LANES
    if padded != n:
        flat = jnp.pad(flat, (0, padded - n))
    slab = flat.reshape(rows, _LANES)

    grid = (rows // block_rows,)

    out = pl.pallas_call(
        basic_nn_kernel,
        out_shape=jax.ShapeDtypeStruct((rows, _LANES), x.dtype),
        grid=grid,
        in_specs=[
            pl.BlockSpec(memory_space=pltpu.SMEM),                 # scalar params
            pl.BlockSpec((block_rows, _LANES), lambda i: (i, 0)),  # streamed input tiles
        ],
        out_specs=pl.BlockSpec((block_rows, _LANES), lambda i: (i, 0)),
        compiler_params=pltpu.CompilerParams(
            dimension_semantics=("parallel",),      # shard blocks across TCs on v7x
            vmem_limit_bytes=32 * 1024 * 1024,      # explicit cap, safe on every chip
        ),
    )(params, slab)

    return out.reshape(-1)[:n].reshape(orig_shape)


def basic_nn_ref(x, params):
    w00, b00, w01, w10, b10, w11, fb = [params[i] for i in range(7)]
    top = jnp.maximum(x * w00 + b00, 0.0) * w01
    bot = jnp.maximum(x * w10 + b10, 0.0) * w11
    return jnp.maximum(top + bot + fb, 0.0)


if __name__ == "__main__":
    # Deterministic parameters matching the module's __init__ values.
    params = jnp.array(
        [1.7, -0.85, -40.8, 12.6, 0.0, 2.7, -16.0], dtype=jnp.float32
    )

    key = jax.random.PRNGKey(0)
    k_small, k_grid = jax.random.split(key)

    # Small 1-D dose vector in [0, 1], like the original StatQuest example.
    x_small = jax.random.uniform(k_small, (101,), dtype=jnp.float32)
    # Larger 2-D batch that exercises the multi-block parallel grid.
    x_grid = jax.random.uniform(k_grid, (1024, 512), dtype=jnp.float32)

    for x in (x_small, x_grid):
        out = jax.block_until_ready(basic_nn_forward(x, params))
        ref = basic_nn_ref(x, params)
        assert out.shape == x.shape and out.dtype == x.dtype
        assert jnp.allclose(out, ref, atol=1e-5, rtol=1e-5)

    print("KERNEL_OK")
</pallas_src>

<mosaic_0001>
module attributes {stable_mosaic.version = 11 : i64} {
  func.func @basic_nn_kernel(%arg0: i32, %arg1: memref<7xf32, #tpu.memory_space<smem>>, %arg2: memref<8x512xf32, #tpu.memory_space<vmem>>, %arg3: memref<8x512xf32, #tpu.memory_space<vmem>>) attributes {dimension_semantics = [#tpu.dimension_semantics<parallel>], iteration_bounds = array<i64: 1>, scalar_prefetch = 0 : i64, scratch_operands = 0 : i64, tpu.core_type = #tpu.core_type<tc>, window_params = [{transform_indices = @transform_0, window_bounds = array<i64: 7>}, {transform_indices = @transform_1, window_bounds = array<i64: 8, 512>}, {transform_indices = @transform_2, window_bounds = array<i64: 8, 512>}]} {
    %c0 = arith.constant 0 : index
    %0 = memref.load %arg1[%c0] : memref<7xf32, #tpu.memory_space<smem>>
    %c1 = arith.constant 1 : index
    %1 = memref.load %arg1[%c1] : memref<7xf32, #tpu.memory_space<smem>>
    %c2 = arith.constant 2 : index
    %2 = memref.load %arg1[%c2] : memref<7xf32, #tpu.memory_space<smem>>
    %c3 = arith.constant 3 : index
    %3 = memref.load %arg1[%c3] : memref<7xf32, #tpu.memory_space<smem>>
    %c4 = arith.constant 4 : index
    %4 = memref.load %arg1[%c4] : memref<7xf32, #tpu.memory_space<smem>>
    %c5 = arith.constant 5 : index
    %5 = memref.load %arg1[%c5] : memref<7xf32, #tpu.memory_space<smem>>
    %c6 = arith.constant 6 : index
    %6 = memref.load %arg1[%c6] : memref<7xf32, #tpu.memory_space<smem>>
    %c0_0 = arith.constant 0 : index
    %c0_1 = arith.constant 0 : index
    %7 = vector.load %arg2[%c0_0, %c0_1] : memref<8x512xf32, #tpu.memory_space<vmem>>, vector<8x512xf32>
    %8 = vector.broadcast %0 : f32 to vector<8x512xf32>
    %9 = arith.mulf %7, %8 : vector<8x512xf32>
    %10 = vector.broadcast %1 : f32 to vector<8x512xf32>
    %11 = arith.addf %9, %10 : vector<8x512xf32>
    %cst = arith.constant 0.000000e+00 : f32
    %12 = vector.broadcast %cst : f32 to vector<8x512xf32>
    %13 = arith.maximumf %11, %12 : vector<8x512xf32>
    %14 = vector.broadcast %2 : f32 to vector<8x512xf32>
    %15 = arith.mulf %13, %14 : vector<8x512xf32>
    %16 = vector.broadcast %3 : f32 to vector<8x512xf32>
    %17 = arith.mulf %7, %16 : vector<8x512xf32>
    %18 = vector.broadcast %4 : f32 to vector<8x512xf32>
    %19 = arith.addf %17, %18 : vector<8x512xf32>
    %cst_2 = arith.constant 0.000000e+00 : f32
    %20 = vector.broadcast %cst_2 : f32 to vector<8x512xf32>
    %21 = arith.maximumf %19, %20 : vector<8x512xf32>
    %22 = vector.broadcast %5 : f32 to vector<8x512xf32>
    %23 = arith.mulf %21, %22 : vector<8x512xf32>
    %24 = arith.addf %15, %23 : vector<8x512xf32>
    %25 = vector.broadcast %6 : f32 to vector<8x512xf32>
    %26 = arith.addf %24, %25 : vector<8x512xf32>
    %cst_3 = arith.constant 0.000000e+00 : f32
    %27 = vector.broadcast %cst_3 : f32 to vector<8x512xf32>
    %28 = arith.maximumf %26, %27 : vector<8x512xf32>
    %c0_4 = arith.constant 0 : index
    %c0_5 = arith.constant 0 : index
    %29 = vector.load %arg3[%c0_4, %c0_5] : memref<8x512xf32, #tpu.memory_space<vmem>>, vector<8x512xf32>
    tpu.vector_store %arg3[%c0_4, %c0_5], %28 {strides = array<i32>} : memref<8x512xf32, #tpu.memory_space<vmem>>, vector<8x512xf32>,
    return
  }
  func.func @transform_0(%arg0: i32) -> i32 {
    %c0_i32 = arith.constant 0 : i32
    %c0_i32_0 = arith.constant 0 : i32
    return %c0_i32 : i32
  }
  func.func @transform_1(%arg0: i32) -> (i32, i32) {
    %c0_i32 = arith.constant 0 : i32
    %c0_i32_0 = arith.constant 0 : i32
    return %arg0, %c0_i32 : i32, i32
  }
  func.func @transform_2(%arg0: i32) -> (i32, i32) {
    %c0_i32 = arith.constant 0 : i32
    %c0_i32_0 = arith.constant 0 : i32
    return %arg0, %c0_i32 : i32, i32
  }
}

</mosaic_0001>

<llo_original>
// kernel: tpu_custom_call.1
$region0: #{tpu_custom_call.1}
  #allocation0 [shape = 'u32[]', space=smem, size = 0x4, offset = 0x4, fixed_abs, tag = 'smem constant byte address 0x4 - core index']
  #allocation1 [shape = 'u32[144,128]{1,0:T(1,128)}', space=vmem, size = 0x12000, scoped, tag = 'internal scratch']
  %s0 = inlined_call_operand.hbm [shape: f32[7], index: 0, kind: input, shape index: {}]
  %s1 = inlined_call_operand.hbm [shape: f32[8,512], index: 1, kind: input, shape index: {}]
  %s2 = inlined_call_operand.hbm [shape: f32[8,512], index: 2, kind: output, shape index: {}]
  %s3 = sld [smem:[#allocation0]]
  $region26: #{tpu_custom_call.1} parent=0
    _
  %s5 = ssub.s32 1, %s3
  %s6 = scalar_select 0, %s5, %s3
  $region1: #{tpu_custom_call.1} parent=0
    #allocation2 [shape = 'u8[512]{0}', space=smem, size = 0x200, scoped, tag = 'input window, operand 0, single buffered']
    #allocation3 [shape = 's32[1]{0}', space=sflag, size = 0x4, scoped, tag = 'scoped memory for tpu_custom_call.1']
    #allocation4 [shape = 's32[1]{0}', space=sflag, size = 0x4, scoped, tag = 'scoped memory for tpu_custom_call.1']
    #allocation5 [shape = 's32[1]{0}', space=sflag, size = 0x4, scoped, tag = 'scoped memory for tpu_custom_call.1']
    #allocation6 [shape = 'u8[16384]{0}', space=vmem, size = 0x4000, scoped, tag = 'input window, operand 1, single buffered']
    #allocation7 [shape = 'u8[16384]{0}', space=vmem, size = 0x4000, scoped, tag = 'output window, operand 0, single buffered']
    %7 = vsyncpa [#allocation5], 0
    %8 = vsyncpa [#allocation3], 0
    %9 = vsyncpa [#allocation4], 0
    // Predicated region
    $region2: #{tpu_custom_call.1} parent=1 // pred_check
      _
    $region3: #{tpu_custom_call.1} parent=1 // pred_check_branch
      %11 = sbr.rel (0) target = $region5
    $region4: #{tpu_custom_call.1} parent=1 // pred_region
      %s13 = ssub.s32 16, 16
      %14 = vsyncadd [#allocation5], %s13
      %17 = dma.hbm_to_smem %s0, 16, [#allocation2], [#allocation5]
    $region5: #{tpu_custom_call.1} parent=1 // pred_fallthru
      _
    // Predicated region
    $region6: #{tpu_custom_call.1} parent=1 // pred_check
      _
    $region7: #{tpu_custom_call.1} parent=1 // pred_check_branch
      %19 = sbr.rel (0) target = $region9
    $region8: #{tpu_custom_call.1} parent=1 // pred_region
      %s21 = ssub.s32 512, 512
      %22 = vsyncadd [#allocation3], %s21
      %s24 = sshll.u32 [#allocation6], 4
      %s25 = int_to_ptr.vmem [resolvable:$true] %s24
      %27 = dma.hbm_to_vmem [thread:$0]  %s1, 512, %s25, [#allocation3]
    $region9: #{tpu_custom_call.1} parent=1 // pred_fallthru
      _
    // Predicated region
    $region10: #{tpu_custom_call.1} parent=1 // pred_check
      _
    $region11: #{tpu_custom_call.1} parent=1 // pred_check_branch
      %29 = sbr.rel (0) target = $region13
    $region12: #{tpu_custom_call.1} parent=1 // pred_region
      %30 = dma.done [#allocation5], 16
    $region13: #{tpu_custom_call.1} parent=1 // pred_fallthru
      _
    // Predicated region
    $region14: #{tpu_custom_call.1} parent=1 // pred_check
      _
    $region15: #{tpu_custom_call.1} parent=1 // pred_check_branch
      %32 = sbr.rel (0) target = $region17
    $region16: #{tpu_custom_call.1} parent=1 // pred_region
      %33 = dma.done [#allocation3], 512
    $region17: #{tpu_custom_call.1} parent=1 // pred_fallthru
      _
    %34 = sfence
    %s35 = sld [smem:[#allocation2]]
    %s36 = sld [smem:[#allocation2 + $0x1]]
    %s37 = sld [smem:[#allocation2 + $0x2]]
    %s38 = sld [smem:[#allocation2 + $0x3]]
    %s39 = sld [smem:[#allocation2 + $0x4]]
    %s40 = sld [smem:[#allocation2 + $0x5]]
    %s41 = sld [smem:[#allocation2 + $0x6]]
    %v42 = vld [vmem:[#allocation6] sm:$0xff]
    %v43 = vld [vmem:[#allocation6 + $0x8] sm:$0xff]
    %v44 = vld [vmem:[#allocation6 + $0x10] sm:$0xff]
    %v45 = vld [vmem:[#allocation6 + $0x18] sm:$0xff]
    %v46 = vstv %s35
    %v47 = vmul.f32 %v42, %v46
    %v48 = vmul.f32 %v43, %v46
    %v49 = vmul.f32 %v44, %v46
    %v50 = vmul.f32 %v45, %v46
    %v51 = vstv %s36
    %v52 = vadd.f32 %v47, %v51
    %v53 = vadd.f32 %v48, %v51
    %v54 = vadd.f32 %v49, %v51
    %v55 = vadd.f32 %v50, %v51
    %v56 = vmax.f32 %v52, 0.0
    %v57 = vmax.f32 %v53, 0.0
    %v58 = vmax.f32 %v54, 0.0
    %v59 = vmax.f32 %v55, 0.0
    %v60 = vstv %s37
    %v61 = vmul.f32 %v56, %v60
    %v62 = vmul.f32 %v57, %v60
    %v63 = vmul.f32 %v58, %v60
    %v64 = vmul.f32 %v59, %v60
    %v65 = vstv %s38
    %v66 = vmul.f32 %v42, %v65
    %v67 = vmul.f32 %v43, %v65
    %v68 = vmul.f32 %v44, %v65
    %v69 = vmul.f32 %v45, %v65
    %v70 = vstv %s39
    %v71 = vadd.f32 %v66, %v70
    %v72 = vadd.f32 %v67, %v70
    %v73 = vadd.f32 %v68, %v70
    %v74 = vadd.f32 %v69, %v70
    %v75 = vmax.f32 %v71, 0.0
    %v76 = vmax.f32 %v72, 0.0
    %v77 = vmax.f32 %v73, 0.0
    %v78 = vmax.f32 %v74, 0.0
    %v79 = vstv %s40
    %v80 = vmul.f32 %v75, %v79
    %v81 = vmul.f32 %v76, %v79
    %v82 = vmul.f32 %v77, %v79
    %v83 = vmul.f32 %v78, %v79
    %v84 = vadd.f32 %v61, %v80
    %v85 = vadd.f32 %v62, %v81
    %v86 = vadd.f32 %v63, %v82
    %v87 = vadd.f32 %v64, %v83
    %v88 = vstv %s41
    %v89 = vadd.f32 %v84, %v88
    %v90 = vadd.f32 %v85, %v88
    %v91 = vadd.f32 %v86, %v88
    %v92 = vadd.f32 %v87, %v88
    %v93 = vmax.f32 %v89, 0.0
    %v94 = vmax.f32 %v90, 0.0
    %v95 = vmax.f32 %v91, 0.0
    %v96 = vmax.f32 %v92, 0.0
    %97 = vst [vmem:[#allocation7] sm:$0xff] %v93
    %98 = vst [vmem:[#allocation7 + $0x8] sm:$0xff] %v94
    %99 = vst [vmem:[#allocation7 + $0x10] sm:$0xff] %v95
    %100 = vst [vmem:[#allocation7 + $0x18] sm:$0xff] %v96
    // Predicated region
    $region18: #{tpu_custom_call.1} parent=1 // pred_check
      _
    $region19: #{tpu_custom_call.1} parent=1 // pred_check_branch
      %102 = sbr.rel (0) target = $region21
    $region20: #{tpu_custom_call.1} parent=1 // pred_region
      %s104 = ssub.s32 512, 512
      %105 = vsyncadd [#allocation4], %s104
      %s107 = sshll.u32 [#allocation7], 4
      %s108 = int_to_ptr.vmem [resolvable:$true] %s107
      %110 = dma.vmem_to_hbm [thread:$0]  %s108, 512, %s2, [#allocation4]
    $region21: #{tpu_custom_call.1} parent=1 // pred_fallthru
      _
    // Predicated region
    $region22: #{tpu_custom_call.1} parent=1 // pred_check
      _
    $region23: #{tpu_custom_call.1} parent=1 // pred_check_branch
      %112 = sbr.rel (0) target = $region25
    $region24: #{tpu_custom_call.1} parent=1 // pred_region
      %113 = dma.done [#allocation4], 512
    $region25: #{tpu_custom_call.1} parent=1 // pred_fallthru
      _
    %114 = vsyncpa [#allocation3], 1
    %115 = vsyncpa [#allocation4], 1
    %116 = vsyncpa [#allocation5], 1

</llo_original>
